<compile_context>
chip_gen: v7x
topology: tpu7x:2x2x1
jax: 0.10.0
libtpu: 0.0.40
codegen_flags: <defaults>
</compile_context>

<pallas_src>
import functools

import jax
import jax.numpy as jnp
from jax.experimental import pallas as pl
from jax.experimental.pallas import tpu as pltpu


# ----------------------------------------------------------------------------
# Fused Pallas kernel: one batch tile per grid step, everything lane-dense.
# ----------------------------------------------------------------------------
def fused_gnn_kernel(*refs, n_proc, n_gfl, n_read, gfl_K, E,
                     process_relu, readout_relu):
    # refs = [x_ref, (m_ref if n_gfl>0), proc (W,b)*, gfl (H,b)*, readout (W,b)*, out_ref]
    it = iter(refs)
    x_ref = next(it)
    m_ref = next(it) if n_gfl > 0 else None
    p_refs = [next(it) for _ in range(2 * n_proc)]
    g_refs = [next(it) for _ in range(2 * n_gfl)]
    r_refs = [next(it) for _ in range(2 * n_read)]
    out_ref = next(it)

    h = x_ref[0].astype(jnp.float32)                       # (C0, LANE)

    # ---- process MLP (pointwise per (b, t, n) lane) ----
    for l in range(n_proc):
        w = p_refs[2 * l][...].astype(jnp.float32)         # (D_out, D_in)
        b = p_refs[2 * l + 1][...].astype(jnp.float32)     # (D_out, 1)
        h = jnp.dot(w, h, preferred_element_type=jnp.float32) + b
        if process_relu[l]:
            h = jnp.maximum(h, 0.0)

    # ---- graph-filter layers (GraphFilter + ReLU fused) ----
    if n_gfl > 0:
        for l in range(n_gfl):
            K = gfl_K[l]
            Hfull = g_refs[2 * l][...].astype(jnp.float32)     # (F_out, E*K*F_in)
            gb = g_refs[2 * l + 1][...].astype(jnp.float32)    # (F_out, 1)
            # taps[e][k]: k-step delayed diffusions, all lane-dense (F_in, LANE)
            taps = [[None] * K for _ in range(E)]
            for e in range(E):
                taps[e][0] = h
            for k in range(1, K):
                for e in range(E):
                    taps[e][k] = jnp.dot(taps[e][k - 1], m_ref[0, e],
                                         preferred_element_type=jnp.float32)
            if E * K > 1:
                # Sublane-stacked taps, ordered (e, k, f_in) to match H layout.
                z = jnp.concatenate(
                    [taps[e][k] for e in range(E) for k in range(K)], axis=0)
            else:
                z = taps[0][0]
            # One fused projection over all taps/edge-features.
            y = jnp.dot(Hfull, z, preferred_element_type=jnp.float32) + gb
            h = jnp.maximum(y, 0.0)                            # sigma = ReLU

    # ---- readout MLP (pointwise per (b, t, n) lane) ----
    for l in range(n_read):
        w = r_refs[2 * l][...].astype(jnp.float32)
        b = r_refs[2 * l + 1][...].astype(jnp.float32)
        h = jnp.dot(w, h, preferred_element_type=jnp.float32) + b
        if readout_relu[l]:
            h = jnp.maximum(h, 0.0)

    # Single lane-dense, unmasked store.
    out_ref[0] = h.astype(out_ref.dtype)


# ----------------------------------------------------------------------------
# One-time parameter relayout (hoisted out of the forward path)
# ----------------------------------------------------------------------------
def prepare_gnn_params(params):
    proc_w, proc_relu = [], []
    for (W, b, relu) in params['process']:
        proc_w += [jnp.asarray(W).T, jnp.reshape(jnp.asarray(b), (-1, 1))]
        proc_relu.append(bool(relu))
    gfl_w, gfl_K = [], []
    for (H, bias) in params['gfl']:
        F_out, E_h, K, F_in = H.shape
        # Column order (e, k, f_in) == torch's H.reshape(F_out, E*K*F_in).
        gfl_w += [jnp.reshape(jnp.asarray(H), (F_out, E_h * K * F_in)),
                  jnp.reshape(jnp.asarray(bias), (F_out, 1))]
        gfl_K.append(int(K))
    ro_w, ro_relu = [], []
    for (W, b, relu) in params['readout']:
        ro_w += [jnp.asarray(W).T, jnp.reshape(jnp.asarray(b), (-1, 1))]
        ro_relu.append(bool(relu))
    return dict(proc=proc_w, proc_relu=tuple(proc_relu),
                gfl=gfl_w, gfl_K=tuple(gfl_K),
                readout=ro_w, readout_relu=tuple(ro_relu))


def _replicated_spec(arr):
    nd = arr.ndim
    return pl.BlockSpec(arr.shape, lambda g, _n=nd: (0,) * _n)


# ----------------------------------------------------------------------------
# Wrapper
# ----------------------------------------------------------------------------
def gnn_forward(x, S, prepared, *, b_tile=None):
    """GNN.forward.  x: (B, T, n_signals[0], N), S: (B,T,N,N) or (B,T,E,N,N)."""
    if S.ndim == 4:
        S = S[:, :, None]                                   # (B, T, E, N, N)
    B, T, C0, N = x.shape
    E = S.shape[2]
    TN = T * N

    n_proc = len(prepared['proc_relu'])
    n_gfl = len(prepared['gfl_K'])
    n_read = len(prepared['readout_relu'])

    # Batch tiling: widen the lane axis for MXU fill on larger batches while
    # keeping grid length >= 2 (both v7x TensorCores busy).
    if b_tile is None:
        b_tile = 2 if (B % 2 == 0 and B >= 4) else 1
    assert B % b_tile == 0
    n_tiles = B // b_tile
    LANE = b_tile * TN

    # Lane-dense input: (n_tiles, C0, LANE), lane index = (b_in_tile, t, n).
    x_l = (x.transpose(0, 2, 1, 3).reshape(B, C0, TN)
             .reshape(n_tiles, b_tile, C0, TN)
             .transpose(0, 2, 1, 3).reshape(n_tiles, C0, LANE))

    operands = [x_l]
    in_specs = [pl.BlockSpec((1, C0, LANE), lambda g: (g, 0, 0))]

    if n_gfl > 0:
        # Prebuilt shift-and-diffuse operator (XLA, once per call):
        #   Msup[b, e, (t-1)N:tN, tN:(t+1)N] = S[b, t, e]   (block t=0 stays 0)
        # then block-diagonal across the batch tile -> (n_tiles, E, LANE, LANE).
        eye_sup = jnp.eye(T, k=1, dtype=jnp.float32)
        Msup = jnp.einsum('ij,bjemn->beimjn', eye_sup,
                          S.astype(jnp.float32)).reshape(B, E, TN, TN)
        eye_b = jnp.eye(b_tile, dtype=jnp.float32)
        Mbig = jnp.einsum('pq,gpexy->gepxqy', eye_b,
                          Msup.reshape(n_tiles, b_tile, E, TN, TN)
                          ).reshape(n_tiles, E, LANE, LANE)
        operands.append(Mbig)
        in_specs.append(pl.BlockSpec((1, E, LANE, LANE),
                                     lambda g: (g, 0, 0, 0)))

    weights = list(prepared['proc']) + list(prepared['gfl']) + list(prepared['readout'])
    operands += weights
    in_specs += [_replicated_spec(w) for w in weights]

    if n_read > 0:
        F_last = prepared['readout'][-2].shape[0]
    elif n_gfl > 0:
        F_last = prepared['gfl'][-2].shape[0]
    elif n_proc > 0:
        F_last = prepared['proc'][-2].shape[0]
    else:
        F_last = C0

    kernel = functools.partial(
        fused_gnn_kernel, n_proc=n_proc, n_gfl=n_gfl, n_read=n_read,
        gfl_K=prepared['gfl_K'], E=E,
        process_relu=prepared['proc_relu'],
        readout_relu=prepared['readout_relu'])

    y_l = pl.pallas_call(
        kernel,
        out_shape=jax.ShapeDtypeStruct((n_tiles, F_last, LANE), x.dtype),
        grid=(n_tiles,),
        in_specs=in_specs,
        out_specs=pl.BlockSpec((1, F_last, LANE), lambda g: (g, 0, 0)),
        compiler_params=pltpu.CompilerParams(
            dimension_semantics=("parallel",)),
    )(*operands)

    # Unfold lane-dense output back to (B, T, F_last, N) in XLA.
    y = (y_l.reshape(n_tiles, F_last, b_tile, T, N)
             .transpose(0, 2, 3, 1, 4).reshape(B, T, F_last, N))
    return y


# ----------------------------------------------------------------------------
# Pure-JAX reference (mirrors the PyTorch module semantics) for validation
# ----------------------------------------------------------------------------
def _graph_filter_ref(x, S, H, bias):
    B, T, F_in, N = x.shape
    F_out, E, K, _ = H.shape
    cur = jnp.broadcast_to(x[:, :, None], (B, T, E, F_in, N))
    z = [cur]
    for _ in range(1, K):
        cur = jnp.concatenate(
            [jnp.zeros((B, 1, E, F_in, N), x.dtype), cur[:, :-1]], axis=1)
        cur = jnp.matmul(cur, S)                # (B,T,E,F_in,N) @ (B,T,E,N,N)
        z.append(cur)
    z = jnp.stack(z, axis=2)                    # (B, T, K, E, F_in, N)
    z = jnp.transpose(z, (0, 1, 5, 3, 2, 4)).reshape(B, T, N, E * K * F_in)
    y = z @ H.reshape(F_out, E * K * F_in).T    # (B, T, N, F_out)
    y = jnp.transpose(y, (0, 1, 3, 2)) + bias
    return y


def _gnn_ref(x, S, params):
    if S.ndim == 4:
        S = S[:, :, None]
    z = jnp.transpose(x, (0, 1, 3, 2))
    for (W, b, relu_after) in params['process']:
        z = z @ W + b
        if relu_after:
            z = jnp.maximum(z, 0.0)
    z = jnp.transpose(z, (0, 1, 3, 2))
    for (H, bias) in params['gfl']:
        z = jnp.maximum(_graph_filter_ref(z, S, H, bias), 0.0)
    y = jnp.transpose(z, (0, 1, 3, 2))
    for (W, b, relu_after) in params['readout']:
        y = y @ W + b
        if relu_after:
            y = jnp.maximum(y, 0.0)
    return jnp.transpose(y, (0, 1, 3, 2))


# ----------------------------------------------------------------------------
# Main
# ----------------------------------------------------------------------------
if __name__ == "__main__":
    key = jax.random.PRNGKey(0)

    # Small, module-consistent configuration.
    B, T, N = 2, 8, 16
    n_signals = [3, 6]        # process: Linear(3->6), ReLU, Linear(6->F[0])
    F = [4, 8]                # one GraphFilter layer: F_in=4 -> F_out=8
    K = [3]                   # 3 filter taps
    E = 1                     # edge features
    n_readout = [5, 2]        # readout: Linear(8->5), ReLU, Linear(5->2)
    # nonlinearity = ReLU (torch.nn.ReLU), bias = True

    def nrm(k, shape, scale=0.1):
        return (scale * jax.random.normal(k, shape)).astype(jnp.float32)

    ks = iter(jax.random.split(key, 32))

    # process params: (W: (in,out), b: (out,), relu_after)
    process = [
        (nrm(next(ks), (n_signals[0], n_signals[1])), nrm(next(ks), (n_signals[1],)), True),
        (nrm(next(ks), (n_signals[1], F[0])),         nrm(next(ks), (F[0],)),         False),
    ]
    # graph filter params: H (F_out, E, K, F_in), bias (F_out, 1)
    gfl = [
        (nrm(next(ks), (F[1], E, K[0], F[0])), nrm(next(ks), (F[1], 1))),
    ]
    # readout params
    readout = [
        (nrm(next(ks), (F[1], n_readout[0])),         nrm(next(ks), (n_readout[0],)), True),
        (nrm(next(ks), (n_readout[0], n_readout[1])), nrm(next(ks), (n_readout[1],)), False),
    ]
    params = {'process': process, 'gfl': gfl, 'readout': readout}

    # One-time parameter relayout (hoisted out of the forward path).
    prepared = prepare_gnn_params(params)

    # Inputs.
    kx, ks_ = jax.random.split(jax.random.PRNGKey(0))
    x = nrm(kx, (B, T, n_signals[0], N), scale=1.0)      # (B, T, n_signals[0], N)
    S = nrm(ks_, (B, T, N, N), scale=0.1)                # (B, T, N, N) GSO

    y = gnn_forward(x, S, prepared)
    y = jax.block_until_ready(y)

    y_ref = _gnn_ref(x, S, params)
    assert y.shape == (B, T, n_readout[-1], N), y.shape
    assert jnp.allclose(y, y_ref, atol=1e-4, rtol=1e-4), "mismatch vs reference"

    print("KERNEL_OK")
</pallas_src>

<mosaic_0001>
module attributes {stable_mosaic.version = 11 : i64} {
  func.func @fused_gnn_kernel(%arg0: i32, %arg1: memref<1x3x128xf32, #tpu.memory_space<vmem>>, %arg2: memref<1x1x128x128xf32, #tpu.memory_space<vmem>>, %arg3: memref<6x3xf32, #tpu.memory_space<vmem>>, %arg4: memref<6x1xf32, #tpu.memory_space<vmem>>, %arg5: memref<4x6xf32, #tpu.memory_space<vmem>>, %arg6: memref<4x1xf32, #tpu.memory_space<vmem>>, %arg7: memref<8x12xf32, #tpu.memory_space<vmem>>, %arg8: memref<8x1xf32, #tpu.memory_space<vmem>>, %arg9: memref<5x8xf32, #tpu.memory_space<vmem>>, %arg10: memref<5x1xf32, #tpu.memory_space<vmem>>, %arg11: memref<2x5xf32, #tpu.memory_space<vmem>>, %arg12: memref<2x1xf32, #tpu.memory_space<vmem>>, %arg13: memref<1x2x128xf32, #tpu.memory_space<vmem>>) attributes {dimension_semantics = [#tpu.dimension_semantics<parallel>], iteration_bounds = array<i64: 2>, scalar_prefetch = 0 : i64, scratch_operands = 0 : i64, tpu.core_type = #tpu.core_type<tc>, window_params = [{transform_indices = @transform_0, window_bounds = array<i64: 1, 3, 128>}, {transform_indices = @transform_1, window_bounds = array<i64: 1, 1, 128, 128>}, {pipeline_mode = #tpu.pipeline_mode<synchronous>, transform_indices = @transform_2, window_bounds = array<i64: 6, 3>}, {pipeline_mode = #tpu.pipeline_mode<synchronous>, transform_indices = @transform_3, window_bounds = array<i64: 6, 1>}, {pipeline_mode = #tpu.pipeline_mode<synchronous>, transform_indices = @transform_4, window_bounds = array<i64: 4, 6>}, {pipeline_mode = #tpu.pipeline_mode<synchronous>, transform_indices = @transform_5, window_bounds = array<i64: 4, 1>}, {pipeline_mode = #tpu.pipeline_mode<synchronous>, transform_indices = @transform_6, window_bounds = array<i64: 8, 12>}, {pipeline_mode = #tpu.pipeline_mode<synchronous>, transform_indices = @transform_7, window_bounds = array<i64: 8, 1>}, {pipeline_mode = #tpu.pipeline_mode<synchronous>, transform_indices = @transform_8, window_bounds = array<i64: 5, 8>}, {pipeline_mode = #tpu.pipeline_mode<synchronous>, transform_indices = @transform_9, window_bounds = array<i64: 5, 1>}, {pipeline_mode = #tpu.pipeline_mode<synchronous>, transform_indices = @transform_10, window_bounds = array<i64: 2, 5>}, {pipeline_mode = #tpu.pipeline_mode<synchronous>, transform_indices = @transform_11, window_bounds = array<i64: 2, 1>}, {transform_indices = @transform_12, window_bounds = array<i64: 1, 2, 128>}]} {
    %c0 = arith.constant 0 : index
    %c0_0 = arith.constant 0 : index
    %c0_1 = arith.constant 0 : index
    %0 = vector.load %arg1[%c0, %c0_0, %c0_1] : memref<1x3x128xf32, #tpu.memory_space<vmem>>, vector<1x3x128xf32>
    %1 = vector.shape_cast %0 : vector<1x3x128xf32> to vector<3x128xf32>
    %c0_2 = arith.constant 0 : index
    %c0_3 = arith.constant 0 : index
    %2 = vector.load %arg3[%c0_2, %c0_3] : memref<6x3xf32, #tpu.memory_space<vmem>>, vector<6x3xf32>
    %c0_4 = arith.constant 0 : index
    %c0_5 = arith.constant 0 : index
    %3 = vector.load %arg4[%c0_4, %c0_5] : memref<6x1xf32, #tpu.memory_space<vmem>>, vector<6x1xf32>
    %cst = arith.constant dense<0.000000e+00> : vector<6x128xf32>
    %4 = tpu.matmul %2, %1, %cst {dimension_numbers = #tpu.dot_dimension_numbers<[1], [0], [0], [1], [0, 0, 1, 1], [], []>} : vector<6x3xf32>, vector<3x128xf32>, vector<6x128xf32> -> vector<6x128xf32>
    %5 = vector.broadcast %3 : vector<6x1xf32> to vector<6x128xf32>
    %6 = arith.addf %4, %5 : vector<6x128xf32>
    %cst_6 = arith.constant 0.000000e+00 : f32
    %7 = vector.broadcast %cst_6 : f32 to vector<6x128xf32>
    %8 = arith.maximumf %6, %7 : vector<6x128xf32>
    %c0_7 = arith.constant 0 : index
    %c0_8 = arith.constant 0 : index
    %9 = vector.load %arg5[%c0_7, %c0_8] : memref<4x6xf32, #tpu.memory_space<vmem>>, vector<4x6xf32>
    %c0_9 = arith.constant 0 : index
    %c0_10 = arith.constant 0 : index
    %10 = vector.load %arg6[%c0_9, %c0_10] : memref<4x1xf32, #tpu.memory_space<vmem>>, vector<4x1xf32>
    %cst_11 = arith.constant dense<0.000000e+00> : vector<4x128xf32>
    %11 = tpu.matmul %9, %8, %cst_11 {dimension_numbers = #tpu.dot_dimension_numbers<[1], [0], [0], [1], [0, 0, 1, 1], [], []>} : vector<4x6xf32>, vector<6x128xf32>, vector<4x128xf32> -> vector<4x128xf32>
    %12 = vector.broadcast %10 : vector<4x1xf32> to vector<4x128xf32>
    %13 = arith.addf %11, %12 : vector<4x128xf32>
    %c0_12 = arith.constant 0 : index
    %c0_13 = arith.constant 0 : index
    %14 = vector.load %arg7[%c0_12, %c0_13] : memref<8x12xf32, #tpu.memory_space<vmem>>, vector<8x12xf32>
    %c0_14 = arith.constant 0 : index
    %c0_15 = arith.constant 0 : index
    %15 = vector.load %arg8[%c0_14, %c0_15] : memref<8x1xf32, #tpu.memory_space<vmem>>, vector<8x1xf32>
    %c0_16 = arith.constant 0 : index
    %c0_17 = arith.constant 0 : index
    %c0_18 = arith.constant 0 : index
    %c0_19 = arith.constant 0 : index
    %16 = vector.load %arg2[%c0_16, %c0_17, %c0_18, %c0_19] : memref<1x1x128x128xf32, #tpu.memory_space<vmem>>, vector<1x1x128x128xf32>
    %17 = vector.shape_cast %16 : vector<1x1x128x128xf32> to vector<128x128xf32>
    %cst_20 = arith.constant dense<0.000000e+00> : vector<4x128xf32>
    %18 = tpu.matmul %13, %17, %cst_20 {dimension_numbers = #tpu.dot_dimension_numbers<[1], [0], [0], [1], [0, 0, 1, 1], [], []>} : vector<4x128xf32>, vector<128x128xf32>, vector<4x128xf32> -> vector<4x128xf32>
    %c0_21 = arith.constant 0 : index
    %c0_22 = arith.constant 0 : index
    %c0_23 = arith.constant 0 : index
    %c0_24 = arith.constant 0 : index
    %19 = vector.load %arg2[%c0_21, %c0_22, %c0_23, %c0_24] : memref<1x1x128x128xf32, #tpu.memory_space<vmem>>, vector<1x1x128x128xf32>
    %20 = vector.shape_cast %19 : vector<1x1x128x128xf32> to vector<128x128xf32>
    %cst_25 = arith.constant dense<0.000000e+00> : vector<4x128xf32>
    %21 = tpu.matmul %18, %20, %cst_25 {dimension_numbers = #tpu.dot_dimension_numbers<[1], [0], [0], [1], [0, 0, 1, 1], [], []>} : vector<4x128xf32>, vector<128x128xf32>, vector<4x128xf32> -> vector<4x128xf32>
    %22 = tpu.concatenate %13, %18, %21 in 0 : vector<4x128xf32>, vector<4x128xf32>, vector<4x128xf32> -> vector<12x128xf32>
    %cst_26 = arith.constant dense<0.000000e+00> : vector<8x128xf32>
    %23 = tpu.matmul %14, %22, %cst_26 {dimension_numbers = #tpu.dot_dimension_numbers<[1], [0], [0], [1], [0, 0, 1, 1], [], []>} : vector<8x12xf32>, vector<12x128xf32>, vector<8x128xf32> -> vector<8x128xf32>
    %24 = vector.broadcast %15 : vector<8x1xf32> to vector<8x128xf32>
    %25 = arith.addf %23, %24 : vector<8x128xf32>
    %cst_27 = arith.constant 0.000000e+00 : f32
    %26 = vector.broadcast %cst_27 : f32 to vector<8x128xf32>
    %27 = arith.maximumf %25, %26 : vector<8x128xf32>
    %c0_28 = arith.constant 0 : index
    %c0_29 = arith.constant 0 : index
    %28 = vector.load %arg9[%c0_28, %c0_29] : memref<5x8xf32, #tpu.memory_space<vmem>>, vector<5x8xf32>
    %c0_30 = arith.constant 0 : index
    %c0_31 = arith.constant 0 : index
    %29 = vector.load %arg10[%c0_30, %c0_31] : memref<5x1xf32, #tpu.memory_space<vmem>>, vector<5x1xf32>
    %cst_32 = arith.constant dense<0.000000e+00> : vector<5x128xf32>
    %30 = tpu.matmul %28, %27, %cst_32 {dimension_numbers = #tpu.dot_dimension_numbers<[1], [0], [0], [1], [0, 0, 1, 1], [], []>} : vector<5x8xf32>, vector<8x128xf32>, vector<5x128xf32> -> vector<5x128xf32>
    %31 = vector.broadcast %29 : vector<5x1xf32> to vector<5x128xf32>
    %32 = arith.addf %30, %31 : vector<5x128xf32>
    %cst_33 = arith.constant 0.000000e+00 : f32
    %33 = vector.broadcast %cst_33 : f32 to vector<5x128xf32>
    %34 = arith.maximumf %32, %33 : vector<5x128xf32>
    %c0_34 = arith.constant 0 : index
    %c0_35 = arith.constant 0 : index
    %35 = vector.load %arg11[%c0_34, %c0_35] : memref<2x5xf32, #tpu.memory_space<vmem>>, vector<2x5xf32>
    %c0_36 = arith.constant 0 : index
    %c0_37 = arith.constant 0 : index
    %36 = vector.load %arg12[%c0_36, %c0_37] : memref<2x1xf32, #tpu.memory_space<vmem>>, vector<2x1xf32>
    %cst_38 = arith.constant dense<0.000000e+00> : vector<2x128xf32>
    %37 = tpu.matmul %35, %34, %cst_38 {dimension_numbers = #tpu.dot_dimension_numbers<[1], [0], [0], [1], [0, 0, 1, 1], [], []>} : vector<2x5xf32>, vector<5x128xf32>, vector<2x128xf32> -> vector<2x128xf32>
    %38 = vector.broadcast %36 : vector<2x1xf32> to vector<2x128xf32>
    %39 = arith.addf %37, %38 : vector<2x128xf32>
    %c0_39 = arith.constant 0 : index
    %c0_40 = arith.constant 0 : index
    %c0_41 = arith.constant 0 : index
    %40 = vector.load %arg13[%c0_39, %c0_40, %c0_41] : memref<1x2x128xf32, #tpu.memory_space<vmem>>, vector<1x2x128xf32>
    %41 = vector.shape_cast %40 : vector<1x2x128xf32> to vector<2x128xf32>
    %42 = vector.shape_cast %39 : vector<2x128xf32> to vector<1x2x128xf32>
    tpu.vector_store %arg13[%c0_39, %c0_40, %c0_41], %42 {strides = array<i32>} : memref<1x2x128xf32, #tpu.memory_space<vmem>>, vector<1x2x128xf32>,
    return
  }
  func.func @transform_0(%arg0: i32) -> (i32, i32, i32) {
    %c0_i32 = arith.constant 0 : i32
    %c0_i32_0 = arith.constant 0 : i32
    %c0_i32_1 = arith.constant 0 : i32
    return %arg0, %c0_i32, %c0_i32_0 : i32, i32, i32
  }
  func.func @transform_1(%arg0: i32) -> (i32, i32, i32, i32) {
    %c0_i32 = arith.constant 0 : i32
    %c0_i32_0 = arith.constant 0 : i32
    %c0_i32_1 = arith.constant 0 : i32
    %c0_i32_2 = arith.constant 0 : i32
    return %arg0, %c0_i32, %c0_i32_0, %c0_i32_1 : i32, i32, i32, i32
  }
  func.func @transform_2(%arg0: i32) -> (i32, i32) {
    %c0_i32 = arith.constant 0 : i32
    %c0_i32_0 = arith.constant 0 : i32
    %c0_i32_1 = arith.constant 0 : i32
    return %c0_i32, %c0_i32_0 : i32, i32
  }
  func.func @transform_3(%arg0: i32) -> (i32, i32) {
    %c0_i32 = arith.constant 0 : i32
    %c0_i32_0 = arith.constant 0 : i32
    %c0_i32_1 = arith.constant 0 : i32
    return %c0_i32, %c0_i32_0 : i32, i32
  }
  func.func @transform_4(%arg0: i32) -> (i32, i32) {
    %c0_i32 = arith.constant 0 : i32
    %c0_i32_0 = arith.constant 0 : i32
    %c0_i32_1 = arith.constant 0 : i32
    return %c0_i32, %c0_i32_0 : i32, i32
  }
  func.func @transform_5(%arg0: i32) -> (i32, i32) {
    %c0_i32 = arith.constant 0 : i32
    %c0_i32_0 = arith.constant 0 : i32
    %c0_i32_1 = arith.constant 0 : i32
    return %c0_i32, %c0_i32_0 : i32, i32
  }
  func.func @transform_6(%arg0: i32) -> (i32, i32) {
    %c0_i32 = arith.constant 0 : i32
    %c0_i32_0 = arith.constant 0 : i32
    %c0_i32_1 = arith.constant 0 : i32
    return %c0_i32, %c0_i32_0 : i32, i32
  }
  func.func @transform_7(%arg0: i32) -> (i32, i32) {
    %c0_i32 = arith.constant 0 : i32
    %c0_i32_0 = arith.constant 0 : i32
    %c0_i32_1 = arith.constant 0 : i32
    return %c0_i32, %c0_i32_0 : i32, i32
  }
  func.func @transform_8(%arg0: i32) -> (i32, i32) {
    %c0_i32 = arith.constant 0 : i32
    %c0_i32_0 = arith.constant 0 : i32
    %c0_i32_1 = arith.constant 0 : i32
    return %c0_i32, %c0_i32_0 : i32, i32
  }
  func.func @transform_9(%arg0: i32) -> (i32, i32) {
    %c0_i32 = arith.constant 0 : i32
    %c0_i32_0 = arith.constant 0 : i32
    %c0_i32_1 = arith.constant 0 : i32
    return %c0_i32, %c0_i32_0 : i32, i32
  }
  func.func @transform_10(%arg0: i32) -> (i32, i32) {
    %c0_i32 = arith.constant 0 : i32
    %c0_i32_0 = arith.constant 0 : i32
    %c0_i32_1 = arith.constant 0 : i32
    return %c0_i32, %c0_i32_0 : i32, i32
  }
  func.func @transform_11(%arg0: i32) -> (i32, i32) {
    %c0_i32 = arith.constant 0 : i32
    %c0_i32_0 = arith.constant 0 : i32
    %c0_i32_1 = arith.constant 0 : i32
    return %c0_i32, %c0_i32_0 : i32, i32
  }
  func.func @transform_12(%arg0: i32) -> (i32, i32, i32) {
    %c0_i32 = arith.constant 0 : i32
    %c0_i32_0 = arith.constant 0 : i32
    %c0_i32_1 = arith.constant 0 : i32
    return %arg0, %c0_i32, %c0_i32_0 : i32, i32, i32
  }
}

</mosaic_0001>

<llo_original>
// kernel: tpu_custom_call.1
$region0: #{tpu_custom_call.1}
  #allocation0 [shape = 'u32[]', space=smem, size = 0x4, offset = 0x4, fixed_abs, tag = 'smem constant byte address 0x4 - core index']
  #allocation1 [shape = 'u32[144,128]{1,0:T(1,128)}', space=vmem, size = 0x12000, scoped, tag = 'internal scratch']
  %s0 = inlined_call_operand.vmem [shape: f32[2,3,128], index: 0, kind: input, shape index: {}]
  %s1 = inlined_call_operand.hbm [shape: f32[2,1,128,128], index: 1, kind: input, shape index: {}]
  %s2 = inlined_call_operand.vmem [shape: f32[6,3], index: 2, kind: input, shape index: {}]
  %s3 = inlined_call_operand.vmem [shape: f32[6,1], index: 3, kind: input, shape index: {}]
  %s4 = inlined_call_operand.vmem [shape: f32[4,6], index: 4, kind: input, shape index: {}]
  %s5 = inlined_call_operand.vmem [shape: f32[4,1], index: 5, kind: input, shape index: {}]
  %s6 = inlined_call_operand.vmem [shape: f32[8,12], index: 6, kind: input, shape index: {}]
  %s7 = inlined_call_operand.vmem [shape: f32[8,1], index: 7, kind: input, shape index: {}]
  %s8 = inlined_call_operand.vmem [shape: f32[5,8], index: 8, kind: input, shape index: {}]
  %s9 = inlined_call_operand.vmem [shape: f32[5,1], index: 9, kind: input, shape index: {}]
  %s10 = inlined_call_operand.vmem [shape: f32[2,5], index: 10, kind: input, shape index: {}]
  %s11 = inlined_call_operand.vmem [shape: f32[2,1], index: 11, kind: input, shape index: {}]
  %s12 = inlined_call_operand.hbm [shape: f32[2,2,128], index: 12, kind: output, shape index: {}]
  %s13 = sld [smem:[#allocation0]]
  $region85: #{tpu_custom_call.1} parent=0
    _
  %s15 = ssub.s32 1, %s13
  %s16 = scalar_select 0, %s15, %s13
  $region1: #{tpu_custom_call.1} parent=0
    #allocation2 [shape = 'u8[131072]{0}', space=vmem, size = 0x20000, scoped, tag = 'input window, operand 1']
    #allocation3 [shape = 's32[2]{0}', space=sflag, size = 0x8, scoped, tag = 'scoped memory for tpu_custom_call.1']
    #allocation4 [shape = 's32[2]{0}', space=sflag, size = 0x8, scoped, tag = 'scoped memory for tpu_custom_call.1']
    #allocation5 [shape = 'u8[2048]{0}', space=vmem, size = 0x800, scoped, tag = 'output window, operand 0']
    %17 = vsyncpa [#allocation3], 0
    %s18 = scalar_lea.sflag [#allocation3], 1
    %19 = vsyncpa %s18, 0
    %20 = vsyncpa [#allocation4], 0
    %s21 = scalar_lea.sflag [#allocation4], 1
    %22 = vsyncpa %s21, 0
    loop: start=0, step=1, limit=4
    $region2: #{tpu_custom_call.1} parent=1 // loop_pre_header
      _
    $region3: #{tpu_custom_call.1} parent=1 // loop_header
      %s24 = sphi 0, %s28
      %p25 = scmp.ge.s32.totalorder %s24, 4
      %s34 = sphi 0, %s36
      %s37 = sphi 0, %s34
      %s38 = sphi 0, %s37
      %s54 = sphi 0, %s38
      %s60 = sphi 0, %s62
      %s63 = sphi 0, %s60
      %s64 = sphi 0, %s63
      %s80 = sphi 0, %s64
      %s84 = sphi 0, %s84
      %s86 = sphi 0, %s84
      %s87 = sphi 0, %s86
      %s101 = sphi 0, %s87
      %s105 = sphi 0, %s105
      %s107 = sphi 0, %s105
      %s108 = sphi 0, %s107
      %s122 = sphi 0, %s108
      %s126 = sphi 0, %s126
      %s128 = sphi 0, %s126
      %s129 = sphi 0, %s128
      %s143 = sphi 0, %s129
      %s147 = sphi 0, %s147
      %s149 = sphi 0, %s147
      %s150 = sphi 0, %s149
      %s164 = sphi 0, %s150
      %s168 = sphi 0, %s168
      %s170 = sphi 0, %s168
      %s171 = sphi 0, %s170
      %s185 = sphi 0, %s171
      %s189 = sphi 0, %s189
      %s191 = sphi 0, %s189
      %s192 = sphi 0, %s191
      %s206 = sphi 0, %s192
      %s210 = sphi 0, %s210
      %s212 = sphi 0, %s210
      %s213 = sphi 0, %s212
      %s227 = sphi 0, %s213
      %s231 = sphi 0, %s231
      %s233 = sphi 0, %s231
      %s234 = sphi 0, %s233
      %s248 = sphi 0, %s234
      %s252 = sphi 0, %s252
      %s254 = sphi 0, %s252
      %s255 = sphi 0, %s254
      %s269 = sphi 0, %s255
      %s273 = sphi 0, %s273
      %s275 = sphi 0, %s273
      %s276 = sphi 0, %s275
      %s290 = sphi 0, %s276
      %s296 = sphi 0, %s298
      %s299 = sphi 0, %s296
      %s300 = sphi 0, %s299
      %s316 = sphi 0, %s300
    $region4: #{tpu_custom_call.1} parent=1 // loop_header_branch
      %27 = sbr.rel (%p25) target = $region8
    $region5: #{tpu_custom_call.1} parent=1 // loop_body
      %s29 = ssub.s32 %s24, 1
      %s30 = ssub.s32 %s24, 2
      %s31 = sadd.s32 %s24, 1
      %s32 = ssub.s32 %s24, %s31
      %p33 = scmp.eq.s32.totalorder %s32, 0
      %s35 = sadd.s32 %s34, 1
      %s36 = scalar_select %p33, %s34, %s35
      %p39 = pneg %p33
      %p40 = scmp.eq.s32.totalorder %s24, 1
      %p41 = por %p39, %p40
      %p42 = scmp.ne.s32.totalorder %s34, %s37
      %p43 = scmp.eq.s32.totalorder %s24, 0
      %p44 = por %p42, %p43
      %p45 = scmp.ne.s32.totalorder %s34, %s37
      %p46 = scmp.eq.s32.totalorder %s29, 1
      %p47 = por %p45, %p46
      %p48 = scmp.ne.s32.totalorder %s37, %s38
      %p49 = scmp.eq.s32.totalorder %s29, 0
      %p50 = por %p48, %p49
      %p51 = scmp.ne.s32.totalorder %s37, %s38
      %p52 = scmp.eq.s32.totalorder %s30, 1
      %p53 = por %p51, %p52
      %p55 = scmp.ne.s32.totalorder %s38, %s54
      %p56 = scmp.eq.s32.totalorder %s30, 0
      %p57 = por %p55, %p56
      %s58 = ssub.s32 %s24, %s31
      %p59 = scmp.eq.s32.totalorder %s58, 0
      %s61 = sadd.s32 %s60, 1
      %s62 = scalar_select %p59, %s60, %s61
      %p65 = pneg %p59
      %p66 = scmp.eq.s32.totalorder %s24, 1
      %p67 = por %p65, %p66
      %p68 = scmp.ne.s32.totalorder %s60, %s63
      %p69 = scmp.eq.s32.totalorder %s24, 0
      %p70 = por %p68, %p69
      %p71 = scmp.ne.s32.totalorder %s60, %s63
      %p72 = scmp.eq.s32.totalorder %s29, 1
      %p73 = por %p71, %p72
      %p74 = scmp.ne.s32.totalorder %s63, %s64
      %p75 = scmp.eq.s32.totalorder %s29, 0
      %p76 = por %p74, %p75
      %p77 = scmp.ne.s32.totalorder %s63, %s64
      %p78 = scmp.eq.s32.totalorder %s30, 1
      %p79 = por %p77, %p78
      %p81 = scmp.ne.s32.totalorder %s64, %s80
      %p82 = scmp.eq.s32.totalorder %s30, 0
      %p83 = por %p81, %p82
      %s85 = sadd.s32 %s84, 1
      %p88 = scmp.eq.s32.totalorder %s24, 1
      %p89 = scmp.ne.s32.totalorder %s84, %s86
      %p90 = scmp.eq.s32.totalorder %s24, 0
      %p91 = por %p89, %p90
      %p92 = scmp.ne.s32.totalorder %s84, %s86
      %p93 = scmp.eq.s32.totalorder %s29, 1
      %p94 = por %p92, %p93
      %p95 = scmp.ne.s32.totalorder %s86, %s87
      %p96 = scmp.eq.s32.totalorder %s29, 0
      %p97 = por %p95, %p96
      %p98 = scmp.ne.s32.totalorder %s86, %s87
      %p99 = scmp.eq.s32.totalorder %s30, 1
      %p100 = por %p98, %p99
      %p102 = scmp.ne.s32.totalorder %s87, %s101
      %p103 = scmp.eq.s32.totalorder %s30, 0
      %p104 = por %p102, %p103
      %s106 = sadd.s32 %s105, 1
      %p109 = scmp.eq.s32.totalorder %s24, 1
      %p110 = scmp.ne.s32.totalorder %s105, %s107
      %p111 = scmp.eq.s32.totalorder %s24, 0
      %p112 = por %p110, %p111
      %p113 = scmp.ne.s32.totalorder %s105, %s107
      %p114 = scmp.eq.s32.totalorder %s29, 1
      %p115 = por %p113, %p114
      %p116 = scmp.ne.s32.totalorder %s107, %s108
      %p117 = scmp.eq.s32.totalorder %s29, 0
      %p118 = por %p116, %p117
      %p119 = scmp.ne.s32.totalorder %s107, %s108
      %p120 = scmp.eq.s32.totalorder %s30, 1
      %p121 = por %p119, %p120
      %p123 = scmp.ne.s32.totalorder %s108, %s122
      %p124 = scmp.eq.s32.totalorder %s30, 0
      %p125 = por %p123, %p124
      %s127 = sadd.s32 %s126, 1
      %p130 = scmp.eq.s32.totalorder %s24, 1
      %p131 = scmp.ne.s32.totalorder %s126, %s128
      %p132 = scmp.eq.s32.totalorder %s24, 0
      %p133 = por %p131, %p132
      %p134 = scmp.ne.s32.totalorder %s126, %s128
      %p135 = scmp.eq.s32.totalorder %s29, 1
      %p136 = por %p134, %p135
      %p137 = scmp.ne.s32.totalorder %s128, %s129
      %p138 = scmp.eq.s32.totalorder %s29, 0
      %p139 = por %p137, %p138
      %p140 = scmp.ne.s32.totalorder %s128, %s129
      %p141 = scmp.eq.s32.totalorder %s30, 1
      %p142 = por %p140, %p141
      %p144 = scmp.ne.s32.totalorder %s129, %s143
      %p145 = scmp.eq.s32.totalorder %s30, 0
      %p146 = por %p144, %p145
      %s148 = sadd.s32 %s147, 1
      %p151 = scmp.eq.s32.totalorder %s24, 1
      %p152 = scmp.ne.s32.totalorder %s147, %s149
      %p153 = scmp.eq.s32.totalorder %s24, 0
      %p154 = por %p152, %p153
      %p155 = scmp.ne.s32.totalorder %s147, %s149
      %p156 = scmp.eq.s32.totalorder %s29, 1
      %p157 = por %p155, %p156
      %p158 = scmp.ne.s32.totalorder %s149, %s150
      %p159 = scmp.eq.s32.totalorder %s29, 0
      %p160 = por %p158, %p159
      %p161 = scmp.ne.s32.totalorder %s149, %s150
      %p162 = scmp.eq.s32.totalorder %s30, 1
      %p163 = por %p161, %p162
      %p165 = scmp.ne.s32.totalorder %s150, %s164
      %p166 = scmp.eq.s32.totalorder %s30, 0
      %p167 = por %p165, %p166
      %s169 = sadd.s32 %s168, 1
      %p172 = scmp.eq.s32.totalorder %s24, 1
      %p173 = scmp.ne.s32.totalorder %s168, %s170
      %p174 = scmp.eq.s32.totalorder %s24, 0
      %p175 = por %p173, %p174
      %p176 = scmp.ne.s32.totalorder %s168, %s170
      %p177 = scmp.eq.s32.totalorder %s29, 1
      %p178 = por %p176, %p177
      %p179 = scmp.ne.s32.totalorder %s170, %s171
      %p180 = scmp.eq.s32.totalorder %s29, 0
      %p181 = por %p179, %p180
      %p182 = scmp.ne.s32.totalorder %s170, %s171
      %p183 = scmp.eq.s32.totalorder %s30, 1
      %p184 = por %p182, %p183
      %p186 = scmp.ne.s32.totalorder %s171, %s185
      %p187 = scmp.eq.s32.totalorder %s30, 0
      %p188 = por %p186, %p187
      %s190 = sadd.s32 %s189, 1
      %p193 = scmp.eq.s32.totalorder %s24, 1
      %p194 = scmp.ne.s32.totalorder %s189, %s191
      %p195 = scmp.eq.s32.totalorder %s24, 0
      %p196 = por %p194, %p195
      %p197 = scmp.ne.s32.totalorder %s189, %s191
      %p198 = scmp.eq.s32.totalorder %s29, 1
      %p199 = por %p197, %p198
      %p200 = scmp.ne.s32.totalorder %s191, %s192
      %p201 = scmp.eq.s32.totalorder %s29, 0
      %p202 = por %p200, %p201
      %p203 = scmp.ne.s32.totalorder %s191, %s192
      %p204 = scmp.eq.s32.totalorder %s30, 1
      %p205 = por %p203, %p204
      %p207 = scmp.ne.s32.totalorder %s192, %s206
      %p208 = scmp.eq.s32.totalorder %s30, 0
      %p209 = por %p207, %p208
      %s211 = sadd.s32 %s210, 1
      %p214 = scmp.eq.s32.totalorder %s24, 1
      %p215 = scmp.ne.s32.totalorder %s210, %s212
      %p216 = scmp.eq.s32.totalorder %s24, 0
      %p217 = por %p215, %p216
      %p218 = scmp.ne.s32.totalorder %s210, %s212
      %p219 = scmp.eq.s32.totalorder %s29, 1
      %p220 = por %p218, %p219
      %p221 = scmp.ne.s32.totalorder %s212, %s213
      %p222 = scmp.eq.s32.totalorder %s29, 0
      %p223 = por %p221, %p222
      %p224 = scmp.ne.s32.totalorder %s212, %s213
      %p225 = scmp.eq.s32.totalorder %s30, 1
      %p226 = por %p224, %p225
      %p228 = scmp.ne.s32.totalorder %s213, %s227
      %p229 = scmp.eq.s32.totalorder %s30, 0
      %p230 = por %p228, %p229
      %s232 = sadd.s32 %s231, 1
      %p235 = scmp.eq.s32.totalorder %s24, 1
      %p236 = scmp.ne.s32.totalorder %s231, %s233
      %p237 = scmp.eq.s32.totalorder %s24, 0
      %p238 = por %p236, %p237
      %p239 = scmp.ne.s32.totalorder %s231, %s233
      %p240 = scmp.eq.s32.totalorder %s29, 1
      %p241 = por %p239, %p240
      %p242 = scmp.ne.s32.totalorder %s233, %s234
      %p243 = scmp.eq.s32.totalorder %s29, 0
      %p244 = por %p242, %p243
      %p245 = scmp.ne.s32.totalorder %s233, %s234
      %p246 = scmp.eq.s32.totalorder %s30, 1
      %p247 = por %p245, %p246
      %p249 = scmp.ne.s32.totalorder %s234, %s248
      %p250 = scmp.eq.s32.totalorder %s30, 0
      %p251 = por %p249, %p250
      %s253 = sadd.s32 %s252, 1
      %p256 = scmp.eq.s32.totalorder %s24, 1
      %p257 = scmp.ne.s32.totalorder %s252, %s254
      %p258 = scmp.eq.s32.totalorder %s24, 0
      %p259 = por %p257, %p258
      %p260 = scmp.ne.s32.totalorder %s252, %s254
      %p261 = scmp.eq.s32.totalorder %s29, 1
      %p262 = por %p260, %p261
      %p263 = scmp.ne.s32.totalorder %s254, %s255
      %p264 = scmp.eq.s32.totalorder %s29, 0
      %p265 = por %p263, %p264
      %p266 = scmp.ne.s32.totalorder %s254, %s255
      %p267 = scmp.eq.s32.totalorder %s30, 1
      %p268 = por %p266, %p267
      %p270 = scmp.ne.s32.totalorder %s255, %s269
      %p271 = scmp.eq.s32.totalorder %s30, 0
      %p272 = por %p270, %p271
      %s274 = sadd.s32 %s273, 1
      %p277 = scmp.eq.s32.totalorder %s24, 1
      %p278 = scmp.ne.s32.totalorder %s273, %s275
      %p279 = scmp.eq.s32.totalorder %s24, 0
      %p280 = por %p278, %p279
      %p281 = scmp.ne.s32.totalorder %s273, %s275
      %p282 = scmp.eq.s32.totalorder %s29, 1
      %p283 = por %p281, %p282
      %p284 = scmp.ne.s32.totalorder %s275, %s276
      %p285 = scmp.eq.s32.totalorder %s29, 0
      %p286 = por %p284, %p285
      %p287 = scmp.ne.s32.totalorder %s275, %s276
      %p288 = scmp.eq.s32.totalorder %s30, 1
      %p289 = por %p287, %p288
      %p291 = scmp.ne.s32.totalorder %s276, %s290
      %p292 = scmp.eq.s32.totalorder %s30, 0
      %p293 = por %p291, %p292
      %s294 = ssub.s32 %s24, %s31
      %p295 = scmp.eq.s32.totalorder %s294, 0
      %s297 = sadd.s32 %s296, 1
      %s298 = scalar_select %p295, %s296, %s297
      %p301 = pneg %p295
      %p302 = scmp.eq.s32.totalorder %s24, 1
      %p303 = por %p301, %p302
      %p304 = scmp.ne.s32.totalorder %s296, %s299
      %p305 = scmp.eq.s32.totalorder %s24, 0
      %p306 = por %p304, %p305
      %p307 = scmp.ne.s32.totalorder %s296, %s299
      %p308 = scmp.eq.s32.totalorder %s29, 1
      %p309 = por %p307, %p308
      %p310 = scmp.ne.s32.totalorder %s299, %s300
      %p311 = scmp.eq.s32.totalorder %s29, 0
      %p312 = por %p310, %p311
      %p313 = scmp.ne.s32.totalorder %s299, %s300
      %p314 = scmp.eq.s32.totalorder %s30, 1
      %p315 = por %p313, %p314
      %p317 = scmp.ne.s32.totalorder %s300, %s316
      %p318 = scmp.eq.s32.totalorder %s30, 0
      %p319 = por %p317, %p318
      %p320 = scmp.le.s32.totalorder 1, %s24
      %p321 = scmp.lt.s32.totalorder %s24, 3
      %p322 = pnand %p320, %p321
      %p323 = pneg %p322
      // Predicated region
      $region9: #{tpu_custom_call.1} parent=5 // pred_check
        _
      $region10: #{tpu_custom_call.1} parent=5 // pred_check_branch
        %325 = sbr.rel (%p322) target = $region12
      $region11: #{tpu_custom_call.1} parent=5 // pred_region
        %s326 = ssub.s32 %s24, 1
        // Predicated region
        $region13: #{tpu_custom_call.1} parent=11 // pred_check
          %p327 = pneg %p97
        $region14: #{tpu_custom_call.1} parent=11 // pred_check_branch
          %329 = sbr.rel (%p327) target = $region16
        $region15: #{tpu_custom_call.1} parent=11 // pred_region
          _
        $region16: #{tpu_custom_call.1} parent=11 // pred_fallthru
          _
        // Predicated region
        $region17: #{tpu_custom_call.1} parent=11 // pred_check
          %p330 = pneg %p118
        $region18: #{tpu_custom_call.1} parent=11 // pred_check_branch
          %332 = sbr.rel (%p330) target = $region20
        $region19: #{tpu_custom_call.1} parent=11 // pred_region
          _
        $region20: #{tpu_custom_call.1} parent=11 // pred_fallthru
          _
        // Predicated region
        $region21: #{tpu_custom_call.1} parent=11 // pred_check
          %p333 = pneg %p139
        $region22: #{tpu_custom_call.1} parent=11 // pred_check_branch
          %335 = sbr.rel (%p333) target = $region24
        $region23: #{tpu_custom_call.1} parent=11 // pred_region
          _
        $region24: #{tpu_custom_call.1} parent=11 // pred_fallthru
          _
        // Predicated region
        $region25: #{tpu_custom_call.1} parent=11 // pred_check
          %p336 = pneg %p160
        $region26: #{tpu_custom_call.1} parent=11 // pred_check_branch
          %338 = sbr.rel (%p336) target = $region28
        $region27: #{tpu_custom_call.1} parent=11 // pred_region
          _
        $region28: #{tpu_custom_call.1} parent=11 // pred_fallthru
          _
        // Predicated region
        $region29: #{tpu_custom_call.1} parent=11 // pred_check
          %p339 = pneg %p181
        $region30: #{tpu_custom_call.1} parent=11 // pred_check_branch
          %341 = sbr.rel (%p339) target = $region32
        $region31: #{tpu_custom_call.1} parent=11 // pred_region
          _
        $region32: #{tpu_custom_call.1} parent=11 // pred_fallthru
          _
        // Predicated region
        $region33: #{tpu_custom_call.1} parent=11 // pred_check
          %p342 = pneg %p202
        $region34: #{tpu_custom_call.1} parent=11 // pred_check_branch
          %344 = sbr.rel (%p342) target = $region36
        $region35: #{tpu_custom_call.1} parent=11 // pred_region
          _
        $region36: #{tpu_custom_call.1} parent=11 // pred_fallthru
          _
        // Predicated region
        $region37: #{tpu_custom_call.1} parent=11 // pred_check
          %p345 = pneg %p223
        $region38: #{tpu_custom_call.1} parent=11 // pred_check_branch
          %347 = sbr.rel (%p345) target = $region40
        $region39: #{tpu_custom_call.1} parent=11 // pred_region
          _
        $region40: #{tpu_custom_call.1} parent=11 // pred_fallthru
          _
        // Predicated region
        $region41: #{tpu_custom_call.1} parent=11 // pred_check
          %p348 = pneg %p244
        $region42: #{tpu_custom_call.1} parent=11 // pred_check_branch
          %350 = sbr.rel (%p348) target = $region44
        $region43: #{tpu_custom_call.1} parent=11 // pred_region
          _
        $region44: #{tpu_custom_call.1} parent=11 // pred_fallthru
          _
        // Predicated region
        $region45: #{tpu_custom_call.1} parent=11 // pred_check
          %p351 = pneg %p265
        $region46: #{tpu_custom_call.1} parent=11 // pred_check_branch
          %353 = sbr.rel (%p351) target = $region48
        $region47: #{tpu_custom_call.1} parent=11 // pred_region
          _
        $region48: #{tpu_custom_call.1} parent=11 // pred_fallthru
          _
        // Predicated region
        $region49: #{tpu_custom_call.1} parent=11 // pred_check
          %p354 = pneg %p286
        $region50: #{tpu_custom_call.1} parent=11 // pred_check_branch
          %356 = sbr.rel (%p354) target = $region52
        $region51: #{tpu_custom_call.1} parent=11 // pred_region
          _
        $region52: #{tpu_custom_call.1} parent=11 // pred_fallthru
          _
      $region12: #{tpu_custom_call.1} parent=5 // pred_fallthru
        _
      %p357 = scmp.lt.s32.totalorder %s24, 2
      // Predicated region
      $region53: #{tpu_custom_call.1} parent=5 // pred_check
        %p358 = pneg %p357
      $region54: #{tpu_custom_call.1} parent=5 // pred_check_branch
        %360 = sbr.rel (%p358) target = $region56
      $region55: #{tpu_custom_call.1} parent=5 // pred_region
        // Predicated region
        $region57: #{tpu_custom_call.1} parent=55 // pred_check
          %p361 = pneg %p44
        $region58: #{tpu_custom_call.1} parent=55 // pred_check_branch
          %363 = sbr.rel (%p361) target = $region60
        $region59: #{tpu_custom_call.1} parent=55 // pred_region
          %p364 = scmp.lt.s32.totalorder %s24, 1
          %s365 = scalar_select %p364, %s24, 1
          %s366 = smul.addr %s365, 4
          %s367 = scalar_lea.vmem %s0, %s366
        $region60: #{tpu_custom_call.1} parent=55 // pred_fallthru
          _
        // Predicated region
        $region61: #{tpu_custom_call.1} parent=55 // pred_check
          %p368 = pneg %p70
        $region62: #{tpu_custom_call.1} parent=55 // pred_check_branch
          %370 = sbr.rel (%p368) target = $region64
        $region63: #{tpu_custom_call.1} parent=55 // pred_region
          %s371 = sand.u32 %s60, 1
          %s372 = scalar_lea.sflag [#allocation3], %s371
          %s373 = sand.u32 %s60, 1
          %s374 = smul.addr %s373, 128
          %s375 = scalar_lea.vmem [#allocation2], %s374
          %s377 = ssub.s32 2048, 2048
          %378 = vsyncadd %s372, %s377
          %s379 = smul.addr %s24, 16
          %s380 = smul.addr %s379, 128
          %s381 = scalar_lea.hbm %s1, %s380
          %s382 = sshll.u32 %s375, 4
          %s383 = int_to_ptr.vmem [resolvable:$true] %s382
          %388 = dma.hbm_to_vmem [thread:$0]  %s381, 2048, %s383, %s372, 128, 128, 8
        $region64: #{tpu_custom_call.1} parent=55 // pred_fallthru
          _
      $region56: #{tpu_custom_call.1} parent=5 // pred_fallthru
        _
      %p389 = scmp.le.s32.totalorder 1, %s24
      %p390 = scmp.lt.s32.totalorder %s24, 3
      %p391 = pnand %p389, %p390
      %p392 = pneg %p391
      // Predicated region
      $region65: #{tpu_custom_call.1} parent=5 // pred_check
        _
      $region66: #{tpu_custom_call.1} parent=5 // pred_check_branch
        %394 = sbr.rel (%p391) target = $region68
      $region67: #{tpu_custom_call.1} parent=5 // pred_region
        %s395 = ssub.s32 %s24, 1
        %s396 = sand.u32 %s63, 1
        %s397 = scalar_lea.sflag [#allocation3], %s396
        %s398 = sand.u32 %s63, 1
        %s399 = smul.addr %s398, 128
        %s400 = scalar_lea.vmem [#allocation2], %s399
        // Predicated region
        $region69: #{tpu_custom_call.1} parent=67 // pred_check
          %p401 = pneg %p76
        $region70: #{tpu_custom_call.1} parent=67 // pred_check_branch
          %403 = sbr.rel (%p401) target = $region72
        $region71: #{tpu_custom_call.1} parent=67 // pred_region
          %404 = dma.done %s397, 2048
        $region72: #{tpu_custom_call.1} parent=67 // pred_fallthru
          _
        %p405 = scmp.lt.s32.totalorder %s29, 1
        %s406 = scalar_select %p405, %s29, 1
        %s407 = smul.addr %s406, 4
        %s408 = scalar_lea.vmem %s0, %s407
        %p409 = pneg %p50
        %p410 = pneg %p47
        %s411 = sand.u32 %s63, 1
        %s412 = scalar_lea.sflag [#allocation3], %s411
        %s413 = sand.u32 %s63, 1
        %s414 = smul.addr %s413, 128
        %s415 = scalar_lea.vmem [#allocation2], %s414
        %p416 = pneg %p76
        %p417 = pneg %p73
        %p418 = pneg %p97
        %p419 = pneg %p94
        %p420 = pneg %p118
        %p421 = pneg %p115
        %p422 = pneg %p139
        %p423 = pneg %p136
        %p424 = pneg %p160
        %p425 = pneg %p157
        %p426 = pneg %p181
        %p427 = pneg %p178
        %p428 = pneg %p202
        %p429 = pneg %p199
        %p430 = pneg %p223
        %p431 = pneg %p220
        %p432 = pneg %p244
        %p433 = pneg %p241
        %p434 = pneg %p265
        %p435 = pneg %p262
        %p436 = pneg %p286
        %p437 = pneg %p283
        %p438 = pneg %p312
        %p439 = pneg %p309
        %s440 = sand.u32 %s299, 1
        %s441 = scalar_lea.sflag [#allocation4], %s440
        %s442 = sand.u32 %s299, 1
        %s443 = smul.addr %s442, 2
        %s444 = scalar_lea.vmem [#allocation5], %s443
        %p445 = scmp.lt.s32.totalorder %s29, 1
        %s446 = scalar_select %p445, %s29, 1
        %s447 = smul.addr %s446, 4
        %s448 = scalar_lea.vmem %s0, %s447
        %v449 = vld [vmem:[%s448] sm:$0x7]
        %v450 = vld [vmem:[%s2] sm:$0x3f]
        %v451 = vld [vmem:[%s3] sm:$0x3f]
        %453 = vset.pattern.permute.xlu0 0
        %454 = vperm.xlu0 %453, %v451
        %v455 = vpop.permute.xlu0 %454
        %vm457 = vcmask 23552
        %v459 = vsel %vm457, %v450, 0
        %vm461 = vcmask 1042432
        %v463 = vsel %vm461, %v449, 0
        %465 = vmatprep.subr.mxu0 0.0
        %466 = vmatpush1.msra.mxu0 %v463
        %467 = vmatprep.subr.mxu0 0.0
        %468 = vmatpush1.msra.mxu0 0.0
        %469 = vmatprep.subr.mxu0 0.0
        %470 = vmatpush1.msra.mxu0 0.0
        %471 = vmatprep.subr.mxu0 0.0
        %472 = vmatpush1.msra.mxu0 0.0
        %473 = vmatprep.subr.mxu0 0.0
        %474 = vmatpush1.msra.mxu0 0.0
        %475 = vmatprep.subr.mxu0 0.0
        %476 = vmatpush1.msra.mxu0 0.0
        %477 = vmatprep.subr.mxu0 0.0
        %478 = vmatpush1.msra.mxu0 0.0
        %479 = vmatprep.subr.mxu0 0.0
        %480 = vmatpush1.msra.mxu0 0.0
        %481 = vmatprep.subr.mxu0 0.0
        %482 = vmatpush1.msra.mxu0 0.0
        %483 = vmatprep.subr.mxu0 0.0
        %484 = vmatpush1.msra.mxu0 0.0
        %485 = vmatprep.subr.mxu0 0.0
        %486 = vmatpush1.msra.mxu0 0.0
        %487 = vmatprep.subr.mxu0 0.0
        %488 = vmatpush1.msra.mxu0 0.0
        %489 = vmatprep.subr.mxu0 0.0
        %490 = vmatpush1.msra.mxu0 0.0
        %491 = vmatprep.subr.mxu0 0.0
        %492 = vmatpush1.msra.mxu0 0.0
        %493 = vmatprep.subr.mxu0 0.0
        %494 = vmatpush1.msra.mxu0 0.0
        %495 = vmatprep.subr.mxu0 0.0
        %496 = vmatpush1.msra.mxu0 0.0
        %497 = vmatprep.subr.mxu0 0.0
        %498 = vmatpush1.msra.mxu0 0.0
        %499 = vmatprep.subr.mxu0 0.0
        %500 = vmatpush1.msra.mxu0 0.0
        %501 = vmatprep.subr.mxu0 0.0
        %502 = vmatpush1.msra.mxu0 0.0
        %503 = vmatprep.subr.mxu0 0.0
        %504 = vmatpush1.msra.mxu0 0.0
        %505 = vmatprep.subr.mxu0 0.0
        %506 = vmatpush1.msra.mxu0 0.0
        %507 = vmatprep.subr.mxu0 0.0
        %508 = vmatpush1.msra.mxu0 0.0
        %509 = vmatprep.subr.mxu0 0.0
        %510 = vmatpush1.msra.mxu0 0.0
        %511 = vmatprep.subr.mxu0 0.0
        %512 = vmatpush1.msra.mxu0 0.0
        %513 = vmatprep.subr.mxu0 0.0
        %514 = vmatpush1.msra.mxu0 0.0
        %515 = vmatprep.subr.mxu0 0.0
        %516 = vmatpush1.msra.mxu0 0.0
        %517 = vmatprep.subr.mxu0 0.0
        %518 = vmatpush1.msra.mxu0 0.0
        %519 = vmatprep.subr.mxu0 0.0
        %520 = vmatpush1.msra.mxu0 0.0
        %521 = vmatprep.subr.mxu0 0.0
        %522 = vmatpush1.msra.mxu0 0.0
        %523 = vmatprep.subr.mxu0 0.0
        %524 = vmatpush1.msra.mxu0 0.0
        %525 = vmatprep.subr.mxu0 0.0
        %526 = vmatpush1.msra.mxu0 0.0
        %527 = vmatprep.subr.mxu0 0.0
        %528 = vmatpush1.msra.mxu0 0.0
        %529 = vmatprep.mubr.f32.mxu0 0.0
        %530 = vmatmul.mubr.f32.gmra.mrb[0].mxu0 %v459
        %v531 = vpop.f32.mrb[0].mxu0
        %v532 = vadd.f32 %v455, %v531
        %v533 = vpop.f32.mrb[0].mxu0
        %534 = vdwg.mxu0
        %v535 = vmax.f32 %v532, 0.0
        %v536 = vld [vmem:[%s4] sm:$0xf]
        %v537 = vld [vmem:[%s5] sm:$0xf]
        %539 = vset.pattern.permute.xlu0 0
        %540 = vperm.xlu0 %539, %v537
        %v541 = vpop.permute.xlu0 %540
        %vm543 = vcmask 48128
        %v545 = vsel %vm543, %v536, 0
        %vm547 = vcmask 1045504
        %v549 = vsel %vm547, %v535, 0
        %551 = vmatprep.subr.mxu0 0.0
        %552 = vmatpush1.msra.mxu0 %v549
        %553 = vmatprep.subr.mxu0 0.0
        %554 = vmatpush1.msra.mxu0 0.0
        %555 = vmatprep.subr.mxu0 0.0
        %556 = vmatpush1.msra.mxu0 0.0
        %557 = vmatprep.subr.mxu0 0.0
        %558 = vmatpush1.msra.mxu0 0.0
        %559 = vmatprep.subr.mxu0 0.0
        %560 = vmatpush1.msra.mxu0 0.0
        %561 = vmatprep.subr.mxu0 0.0
        %562 = vmatpush1.msra.mxu0 0.0
        %563 = vmatprep.subr.mxu0 0.0
        %564 = vmatpush1.msra.mxu0 0.0
        %565 = vmatprep.subr.mxu0 0.0
        %566 = vmatpush1.msra.mxu0 0.0
        %567 = vmatprep.subr.mxu0 0.0
        %568 = vmatpush1.msra.mxu0 0.0
        %569 = vmatprep.subr.mxu0 0.0
        %570 = vmatpush1.msra.mxu0 0.0
        %571 = vmatprep.subr.mxu0 0.0
        %572 = vmatpush1.msra.mxu0 0.0
        %573 = vmatprep.subr.mxu0 0.0
        %574 = vmatpush1.msra.mxu0 0.0
        %575 = vmatprep.subr.mxu0 0.0
        %576 = vmatpush1.msra.mxu0 0.0
        %577 = vmatprep.subr.mxu0 0.0
        %578 = vmatpush1.msra.mxu0 0.0
        %579 = vmatprep.subr.mxu0 0.0
        %580 = vmatpush1.msra.mxu0 0.0
        %581 = vmatprep.subr.mxu0 0.0
        %582 = vmatpush1.msra.mxu0 0.0
        %583 = vmatprep.subr.mxu0 0.0
        %584 = vmatpush1.msra.mxu0 0.0
        %585 = vmatprep.subr.mxu0 0.0
        %586 = vmatpush1.msra.mxu0 0.0
        %587 = vmatprep.subr.mxu0 0.0
        %588 = vmatpush1.msra.mxu0 0.0
        %589 = vmatprep.subr.mxu0 0.0
        %590 = vmatpush1.msra.mxu0 0.0
        %591 = vmatprep.subr.mxu0 0.0
        %592 = vmatpush1.msra.mxu0 0.0
        %593 = vmatprep.subr.mxu0 0.0
        %594 = vmatpush1.msra.mxu0 0.0
        %595 = vmatprep.subr.mxu0 0.0
        %596 = vmatpush1.msra.mxu0 0.0
        %597 = vmatprep.subr.mxu0 0.0
        %598 = vmatpush1.msra.mxu0 0.0
        %599 = vmatprep.subr.mxu0 0.0
        %600 = vmatpush1.msra.mxu0 0.0
        %601 = vmatprep.subr.mxu0 0.0
        %602 = vmatpush1.msra.mxu0 0.0
        %603 = vmatprep.subr.mxu0 0.0
        %604 = vmatpush1.msra.mxu0 0.0
        %605 = vmatprep.subr.mxu0 0.0
        %606 = vmatpush1.msra.mxu0 0.0
        %607 = vmatprep.subr.mxu0 0.0
        %608 = vmatpush1.msra.mxu0 0.0
        %609 = vmatprep.subr.mxu0 0.0
        %610 = vmatpush1.msra.mxu0 0.0
        %611 = vmatprep.subr.mxu0 0.0
        %612 = vmatpush1.msra.mxu0 0.0
        %613 = vmatprep.subr.mxu0 0.0
        %614 = vmatpush1.msra.mxu0 0.0
        %615 = vmatprep.mubr.f32.mxu0 0.0
        %616 = vmatmul.mubr.f32.gmra.mrb[0].mxu0 %v545
        %v617 = vpop.f32.mrb[0].mxu0
        %v618 = vadd.f32 %v541, %v617
        %v619 = vpop.f32.mrb[0].mxu0
        %620 = vdwg.mxu0
        %v621 = vld [vmem:[%s6] sm:$0xff]
        %v622 = vld [vmem:[%s7] sm:$0xff]
        %v623 = vld [vmem:[%s400] sm:$0xff]
        %v624 = vld [vmem:[%s400 + $0x8] sm:$0xff]
        %v625 = vld [vmem:[%s400 + $0x10] sm:$0xff]
        %v626 = vld [vmem:[%s400 + $0x18] sm:$0xff]
        %v627 = vld [vmem:[%s400 + $0x20] sm:$0xff]
        %v628 = vld [vmem:[%s400 + $0x28] sm:$0xff]
        %v629 = vld [vmem:[%s400 + $0x30] sm:$0xff]
        %v630 = vld [vmem:[%s400 + $0x38] sm:$0xff]
        %v631 = vld [vmem:[%s400 + $0x40] sm:$0xff]
        %v632 = vld [vmem:[%s400 + $0x48] sm:$0xff]
        %v633 = vld [vmem:[%s400 + $0x50] sm:$0xff]
        %v634 = vld [vmem:[%s400 + $0x58] sm:$0xff]
        %v635 = vld [vmem:[%s400 + $0x60] sm:$0xff]
        %v636 = vld [vmem:[%s400 + $0x68] sm:$0xff]
        %v637 = vld [vmem:[%s400 + $0x70] sm:$0xff]
        %v638 = vld [vmem:[%s400 + $0x78] sm:$0xff]
        %639 = vmatprep.subr.mxu0 0.0
        %640 = vmatpush1.msra.mxu0 %v623
        %641 = vmatprep.subr.mxu0 0.0
        %642 = vmatpush1.msra.mxu0 %v624
        %643 = vmatprep.subr.mxu0 0.0
        %644 = vmatpush1.msra.mxu0 %v625
        %645 = vmatprep.subr.mxu0 0.0
        %646 = vmatpush1.msra.mxu0 %v626
        %647 = vmatprep.subr.mxu0 0.0
        %648 = vmatpush1.msra.mxu0 %v627
        %649 = vmatprep.subr.mxu0 0.0
        %650 = vmatpush1.msra.mxu0 %v628
        %651 = vmatprep.subr.mxu0 0.0
        %652 = vmatpush1.msra.mxu0 %v629
        %653 = vmatprep.subr.mxu0 0.0
        %654 = vmatpush1.msra.mxu0 %v630
        %655 = vmatprep.subr.mxu0 0.0
        %656 = vmatpush1.msra.mxu0 %v631
        %657 = vmatprep.subr.mxu0 0.0
        %658 = vmatpush1.msra.mxu0 %v632
        %659 = vmatprep.subr.mxu0 0.0
        %660 = vmatpush1.msra.mxu0 %v633
        %661 = vmatprep.subr.mxu0 0.0
        %662 = vmatpush1.msra.mxu0 %v634
        %663 = vmatprep.subr.mxu0 0.0
        %664 = vmatpush1.msra.mxu0 %v635
        %665 = vmatprep.subr.mxu0 0.0
        %666 = vmatpush1.msra.mxu0 %v636
        %667 = vmatprep.subr.mxu0 0.0
        %668 = vmatpush1.msra.mxu0 %v637
        %669 = vmatprep.subr.mxu0 0.0
        %670 = vmatpush1.msra.mxu0 %v638
        %671 = vmatprep.subr.mxu0 0.0
        %672 = vmatpush1.msra.mxu0 0.0
        %673 = vmatprep.subr.mxu0 0.0
        %674 = vmatpush1.msra.mxu0 0.0
        %675 = vmatprep.subr.mxu0 0.0
        %676 = vmatpush1.msra.mxu0 0.0
        %677 = vmatprep.subr.mxu0 0.0
        %678 = vmatpush1.msra.mxu0 0.0
        %679 = vmatprep.subr.mxu0 0.0
        %680 = vmatpush1.msra.mxu0 0.0
        %681 = vmatprep.subr.mxu0 0.0
        %682 = vmatpush1.msra.mxu0 0.0
        %683 = vmatprep.subr.mxu0 0.0
        %684 = vmatpush1.msra.mxu0 0.0
        %685 = vmatprep.subr.mxu0 0.0
        %686 = vmatpush1.msra.mxu0 0.0
        %687 = vmatprep.subr.mxu0 0.0
        %688 = vmatpush1.msra.mxu0 0.0
        %689 = vmatprep.subr.mxu0 0.0
        %690 = vmatpush1.msra.mxu0 0.0
        %691 = vmatprep.subr.mxu0 0.0
        %692 = vmatpush1.msra.mxu0 0.0
        %693 = vmatprep.subr.mxu0 0.0
        %694 = vmatpush1.msra.mxu0 0.0
        %695 = vmatprep.subr.mxu0 0.0
        %696 = vmatpush1.msra.mxu0 0.0
        %697 = vmatprep.subr.mxu0 0.0
        %698 = vmatpush1.msra.mxu0 0.0
        %699 = vmatprep.subr.mxu0 0.0
        %700 = vmatpush1.msra.mxu0 0.0
        %701 = vmatprep.subr.mxu0 0.0
        %702 = vmatpush1.msra.mxu0 0.0
        %703 = vmatprep.mubr.f32.mxu0 0.0
        %704 = vmatmul.mubr.f32.gmra.mrb[0].mxu0 %v618
        %v705 = vpop.f32.mrb[0].mxu0
        %v706 = vadd.f32 0.0, %v705
        %v707 = vpop.f32.mrb[0].mxu0
        %708 = vdwg.mxu0
        %709 = vmatprep.subr.mxu0 0.0
        %710 = vmatpush1.msra.mxu0 %v623
        %711 = vmatprep.subr.mxu0 0.0
        %712 = vmatpush1.msra.mxu0 %v624
        %713 = vmatprep.subr.mxu0 0.0
        %714 = vmatpush1.msra.mxu0 %v625
        %715 = vmatprep.subr.mxu0 0.0
        %716 = vmatpush1.msra.mxu0 %v626
        %717 = vmatprep.subr.mxu0 0.0
        %718 = vmatpush1.msra.mxu0 %v627
        %719 = vmatprep.subr.mxu0 0.0
        %720 = vmatpush1.msra.mxu0 %v628
        %721 = vmatprep.subr.mxu0 0.0
        %722 = vmatpush1.msra.mxu0 %v629
        %723 = vmatprep.subr.mxu0 0.0
        %724 = vmatpush1.msra.mxu0 %v630
        %725 = vmatprep.subr.mxu0 0.0
        %726 = vmatpush1.msra.mxu0 %v631
        %727 = vmatprep.subr.mxu0 0.0
        %728 = vmatpush1.msra.mxu0 %v632
        %729 = vmatprep.subr.mxu0 0.0
        %730 = vmatpush1.msra.mxu0 %v633
        %731 = vmatprep.subr.mxu0 0.0
        %732 = vmatpush1.msra.mxu0 %v634
        %733 = vmatprep.subr.mxu0 0.0
        %734 = vmatpush1.msra.mxu0 %v635
        %735 = vmatprep.subr.mxu0 0.0
        %736 = vmatpush1.msra.mxu0 %v636
        %737 = vmatprep.subr.mxu0 0.0
        %738 = vmatpush1.msra.mxu0 %v637
        %739 = vmatprep.subr.mxu0 0.0
        %740 = vmatpush1.msra.mxu0 %v638
        %741 = vmatprep.subr.mxu0 0.0
        %742 = vmatpush1.msra.mxu0 0.0
        %743 = vmatprep.subr.mxu0 0.0
        %744 = vmatpush1.msra.mxu0 0.0
        %745 = vmatprep.subr.mxu0 0.0
        %746 = vmatpush1.msra.mxu0 0.0
        %747 = vmatprep.subr.mxu0 0.0
        %748 = vmatpush1.msra.mxu0 0.0
        %749 = vmatprep.subr.mxu0 0.0
        %750 = vmatpush1.msra.mxu0 0.0
        %751 = vmatprep.subr.mxu0 0.0
        %752 = vmatpush1.msra.mxu0 0.0
        %753 = vmatprep.subr.mxu0 0.0
        %754 = vmatpush1.msra.mxu0 0.0
        %755 = vmatprep.subr.mxu0 0.0
        %756 = vmatpush1.msra.mxu0 0.0
        %757 = vmatprep.subr.mxu0 0.0
        %758 = vmatpush1.msra.mxu0 0.0
        %759 = vmatprep.subr.mxu0 0.0
        %760 = vmatpush1.msra.mxu0 0.0
        %761 = vmatprep.subr.mxu0 0.0
        %762 = vmatpush1.msra.mxu0 0.0
        %763 = vmatprep.subr.mxu0 0.0
        %764 = vmatpush1.msra.mxu0 0.0
        %765 = vmatprep.subr.mxu0 0.0
        %766 = vmatpush1.msra.mxu0 0.0
        %767 = vmatprep.subr.mxu0 0.0
        %768 = vmatpush1.msra.mxu0 0.0
        %769 = vmatprep.subr.mxu0 0.0
        %770 = vmatpush1.msra.mxu0 0.0
        %771 = vmatprep.subr.mxu0 0.0
        %772 = vmatpush1.msra.mxu0 0.0
        %773 = vmatprep.mubr.f32.mxu0 0.0
        %774 = vmatmul.mubr.f32.gmra.mrb[0].mxu0 %v706
        %v775 = vpop.f32.mrb[0].mxu0
        %v776 = vadd.f32 0.0, %v775
        %v777 = vpop.f32.mrb[0].mxu0
        %778 = vdwg.mxu0
        %v780 = vrot.slane %v706, 4
        %vm782 = vcmask 1043456
        %v783 = vsel %vm782, %v618, %v780
        %785 = vset.pattern.permute.xlu0 0
        %786 = vperm.xlu0 %785, %v622
        %v787 = vpop.permute.xlu0 %786
        %vm789 = vcmask 97280
        %v791 = vsel %vm789, %v621, 0
        %v794 = vsel %vm782, %v776, 0
        %796 = vmatprep.subr.mxu0 0.0
        %797 = vmatpush1.msra.mxu0 %v783
        %798 = vmatprep.subr.mxu0 0.0
        %799 = vmatpush1.msra.mxu0 %v794
        %800 = vmatprep.subr.mxu0 0.0
        %801 = vmatpush1.msra.mxu0 0.0
        %802 = vmatprep.subr.mxu0 0.0
        %803 = vmatpush1.msra.mxu0 0.0
        %804 = vmatprep.subr.mxu0 0.0
        %805 = vmatpush1.msra.mxu0 0.0
        %806 = vmatprep.subr.mxu0 0.0
        %807 = vmatpush1.msra.mxu0 0.0
        %808 = vmatprep.subr.mxu0 0.0
        %809 = vmatpush1.msra.mxu0 0.0
        %810 = vmatprep.subr.mxu0 0.0
        %811 = vmatpush1.msra.mxu0 0.0
        %812 = vmatprep.subr.mxu0 0.0
        %813 = vmatpush1.msra.mxu0 0.0
        %814 = vmatprep.subr.mxu0 0.0
        %815 = vmatpush1.msra.mxu0 0.0
        %816 = vmatprep.subr.mxu0 0.0
        %817 = vmatpush1.msra.mxu0 0.0
        %818 = vmatprep.subr.mxu0 0.0
        %819 = vmatpush1.msra.mxu0 0.0
        %820 = vmatprep.subr.mxu0 0.0
        %821 = vmatpush1.msra.mxu0 0.0
        %822 = vmatprep.subr.mxu0 0.0
        %823 = vmatpush1.msra.mxu0 0.0
        %824 = vmatprep.subr.mxu0 0.0
        %825 = vmatpush1.msra.mxu0 0.0
        %826 = vmatprep.subr.mxu0 0.0
        %827 = vmatpush1.msra.mxu0 0.0
        %828 = vmatprep.subr.mxu0 0.0
        %829 = vmatpush1.msra.mxu0 0.0
        %830 = vmatprep.subr.mxu0 0.0
        %831 = vmatpush1.msra.mxu0 0.0
        %832 = vmatprep.subr.mxu0 0.0
        %833 = vmatpush1.msra.mxu0 0.0
        %834 = vmatprep.subr.mxu0 0.0
        %835 = vmatpush1.msra.mxu0 0.0
        %836 = vmatprep.subr.mxu0 0.0
        %837 = vmatpush1.msra.mxu0 0.0
        %838 = vmatprep.subr.mxu0 0.0
        %839 = vmatpush1.msra.mxu0 0.0
        %840 = vmatprep.subr.mxu0 0.0
        %841 = vmatpush1.msra.mxu0 0.0
        %842 = vmatprep.subr.mxu0 0.0
        %843 = vmatpush1.msra.mxu0 0.0
        %844 = vmatprep.subr.mxu0 0.0
        %845 = vmatpush1.msra.mxu0 0.0
        %846 = vmatprep.subr.mxu0 0.0
        %847 = vmatpush1.msra.mxu0 0.0
        %848 = vmatprep.subr.mxu0 0.0
        %849 = vmatpush1.msra.mxu0 0.0
        %850 = vmatprep.subr.mxu0 0.0
        %851 = vmatpush1.msra.mxu0 0.0
        %852 = vmatprep.subr.mxu0 0.0
        %853 = vmatpush1.msra.mxu0 0.0
        %854 = vmatprep.subr.mxu0 0.0
        %855 = vmatpush1.msra.mxu0 0.0
        %856 = vmatprep.subr.mxu0 0.0
        %857 = vmatpush1.msra.mxu0 0.0
        %858 = vmatprep.subr.mxu0 0.0
        %859 = vmatpush1.msra.mxu0 0.0
        %860 = vmatprep.mubr.f32.mxu0 0.0
        %861 = vmatmul.mubr.f32.gmra.mrb[0].mxu0 %v791
        %v862 = vpop.f32.mrb[0].mxu0
        %v863 = vadd.f32 %v787, %v862
        %v864 = vpop.f32.mrb[0].mxu0
        %865 = vdwg.mxu0
        %v866 = vmax.f32 %v863, 0.0
        %v867 = vld [vmem:[%s8] sm:$0x1f]
        %v868 = vld [vmem:[%s9] sm:$0x1f]
        %870 = vset.pattern.permute.xlu0 0
        %871 = vperm.xlu0 %870, %v868
        %v872 = vpop.permute.xlu0 %871
        %vm874 = vcmask 64512
        %v876 = vsel %vm874, %v867, 0
        %878 = vmatprep.subr.mxu0 0.0
        %879 = vmatpush1.msra.mxu0 %v866
        %880 = vmatprep.subr.mxu0 0.0
        %881 = vmatpush1.msra.mxu0 0.0
        %882 = vmatprep.subr.mxu0 0.0
        %883 = vmatpush1.msra.mxu0 0.0
        %884 = vmatprep.subr.mxu0 0.0
        %885 = vmatpush1.msra.mxu0 0.0
        %886 = vmatprep.subr.mxu0 0.0
        %887 = vmatpush1.msra.mxu0 0.0
        %888 = vmatprep.subr.mxu0 0.0
        %889 = vmatpush1.msra.mxu0 0.0
        %890 = vmatprep.subr.mxu0 0.0
        %891 = vmatpush1.msra.mxu0 0.0
        %892 = vmatprep.subr.mxu0 0.0
        %893 = vmatpush1.msra.mxu0 0.0
        %894 = vmatprep.subr.mxu0 0.0
        %895 = vmatpush1.msra.mxu0 0.0
        %896 = vmatprep.subr.mxu0 0.0
        %897 = vmatpush1.msra.mxu0 0.0
        %898 = vmatprep.subr.mxu0 0.0
        %899 = vmatpush1.msra.mxu0 0.0
        %900 = vmatprep.subr.mxu0 0.0
        %901 = vmatpush1.msra.mxu0 0.0
        %902 = vmatprep.subr.mxu0 0.0
        %903 = vmatpush1.msra.mxu0 0.0
        %904 = vmatprep.subr.mxu0 0.0
        %905 = vmatpush1.msra.mxu0 0.0
        %906 = vmatprep.subr.mxu0 0.0
        %907 = vmatpush1.msra.mxu0 0.0
        %908 = vmatprep.subr.mxu0 0.0
        %909 = vmatpush1.msra.mxu0 0.0
        %910 = vmatprep.subr.mxu0 0.0
        %911 = vmatpush1.msra.mxu0 0.0
        %912 = vmatprep.subr.mxu0 0.0
        %913 = vmatpush1.msra.mxu0 0.0
        %914 = vmatprep.subr.mxu0 0.0
        %915 = vmatpush1.msra.mxu0 0.0
        %916 = vmatprep.subr.mxu0 0.0
        %917 = vmatpush1.msra.mxu0 0.0
        %918 = vmatprep.subr.mxu0 0.0
        %919 = vmatpush1.msra.mxu0 0.0
        %920 = vmatprep.subr.mxu0 0.0
        %921 = vmatpush1.msra.mxu0 0.0
        %922 = vmatprep.subr.mxu0 0.0
        %923 = vmatpush1.msra.mxu0 0.0
        %924 = vmatprep.subr.mxu0 0.0
        %925 = vmatpush1.msra.mxu0 0.0
        %926 = vmatprep.subr.mxu0 0.0
        %927 = vmatpush1.msra.mxu0 0.0
        %928 = vmatprep.subr.mxu0 0.0
        %929 = vmatpush1.msra.mxu0 0.0
        %930 = vmatprep.subr.mxu0 0.0
        %931 = vmatpush1.msra.mxu0 0.0
        %932 = vmatprep.subr.mxu0 0.0
        %933 = vmatpush1.msra.mxu0 0.0
        %934 = vmatprep.subr.mxu0 0.0
        %935 = vmatpush1.msra.mxu0 0.0
        %936 = vmatprep.subr.mxu0 0.0
        %937 = vmatpush1.msra.mxu0 0.0
        %938 = vmatprep.subr.mxu0 0.0
        %939 = vmatpush1.msra.mxu0 0.0
        %940 = vmatprep.subr.mxu0 0.0
        %941 = vmatpush1.msra.mxu0 0.0
        %942 = vmatprep.mubr.f32.mxu0 0.0
        %943 = vmatmul.mubr.f32.gmra.mrb[0].mxu0 %v876
        %v944 = vpop.f32.mrb[0].mxu0
        %v945 = vadd.f32 %v872, %v944
        %v946 = vpop.f32.mrb[0].mxu0
        %947 = vdwg.mxu0
        %v948 = vmax.f32 %v945, 0.0
        %v949 = vld [vmem:[%s10] sm:$0x3]
        %v950 = vld [vmem:[%s11] sm:$0x3]
        %952 = vset.pattern.permute.xlu0 0
        %953 = vperm.xlu0 %952, %v950
        %v954 = vpop.permute.xlu0 %953
        %vm956 = vcmask 39936
        %v958 = vsel %vm956, %v949, 0
        %vm960 = vcmask 1044480
        %v962 = vsel %vm960, %v948, 0
        %964 = vmatprep.subr.mxu0 0.0
        %965 = vmatpush1.msra.mxu0 %v962
        %966 = vmatprep.subr.mxu0 0.0
        %967 = vmatpush1.msra.mxu0 0.0
        %968 = vmatprep.subr.mxu0 0.0
        %969 = vmatpush1.msra.mxu0 0.0
        %970 = vmatprep.subr.mxu0 0.0
        %971 = vmatpush1.msra.mxu0 0.0
        %972 = vmatprep.subr.mxu0 0.0
        %973 = vmatpush1.msra.mxu0 0.0
        %974 = vmatprep.subr.mxu0 0.0
        %975 = vmatpush1.msra.mxu0 0.0
        %976 = vmatprep.subr.mxu0 0.0
        %977 = vmatpush1.msra.mxu0 0.0
        %978 = vmatprep.subr.mxu0 0.0
        %979 = vmatpush1.msra.mxu0 0.0
        %980 = vmatprep.subr.mxu0 0.0
        %981 = vmatpush1.msra.mxu0 0.0
        %982 = vmatprep.subr.mxu0 0.0
        %983 = vmatpush1.msra.mxu0 0.0
        %984 = vmatprep.subr.mxu0 0.0
        %985 = vmatpush1.msra.mxu0 0.0
        %986 = vmatprep.subr.mxu0 0.0
        %987 = vmatpush1.msra.mxu0 0.0
        %988 = vmatprep.subr.mxu0 0.0
        %989 = vmatpush1.msra.mxu0 0.0
        %990 = vmatprep.subr.mxu0 0.0
        %991 = vmatpush1.msra.mxu0 0.0
        %992 = vmatprep.subr.mxu0 0.0
        %993 = vmatpush1.msra.mxu0 0.0
        %994 = vmatprep.subr.mxu0 0.0
        %995 = vmatpush1.msra.mxu0 0.0
        %996 = vmatprep.subr.mxu0 0.0
        %997 = vmatpush1.msra.mxu0 0.0
        %998 = vmatprep.subr.mxu0 0.0
        %999 = vmatpush1.msra.mxu0 0.0
        %1000 = vmatprep.subr.mxu0 0.0
        %1001 = vmatpush1.msra.mxu0 0.0
        %1002 = vmatprep.subr.mxu0 0.0
        %1003 = vmatpush1.msra.mxu0 0.0
        %1004 = vmatprep.subr.mxu0 0.0
        %1005 = vmatpush1.msra.mxu0 0.0
        %1006 = vmatprep.subr.mxu0 0.0
        %1007 = vmatpush1.msra.mxu0 0.0
        %1008 = vmatprep.subr.mxu0 0.0
        %1009 = vmatpush1.msra.mxu0 0.0
        %1010 = vmatprep.subr.mxu0 0.0
        %1011 = vmatpush1.msra.mxu0 0.0
        %1012 = vmatprep.subr.mxu0 0.0
        %1013 = vmatpush1.msra.mxu0 0.0
        %1014 = vmatprep.subr.mxu0 0.0
        %1015 = vmatpush1.msra.mxu0 0.0
        %1016 = vmatprep.subr.mxu0 0.0
        %1017 = vmatpush1.msra.mxu0 0.0
        %1018 = vmatprep.subr.mxu0 0.0
        %1019 = vmatpush1.msra.mxu0 0.0
        %1020 = vmatprep.subr.mxu0 0.0
        %1021 = vmatpush1.msra.mxu0 0.0
        %1022 = vmatprep.subr.mxu0 0.0
        %1023 = vmatpush1.msra.mxu0 0.0
        %1024 = vmatprep.subr.mxu0 0.0
        %1025 = vmatpush1.msra.mxu0 0.0
        %1026 = vmatprep.subr.mxu0 0.0
        %1027 = vmatpush1.msra.mxu0 0.0
        %1028 = vmatprep.mubr.f32.mxu0 0.0
        %1029 = vmatmul.mubr.f32.gmra.mrb[0].mxu0 %v958
        %v1030 = vpop.f32.mrb[0].mxu0
        %v1031 = vadd.f32 %v954, %v1030
        %v1032 = vpop.f32.mrb[0].mxu0
        %1033 = vdwg.mxu0
        %1034 = vst [vmem:[%s444] sm:$0x3] %v1031
        %s1035 = sand.u32 %s299, 1
        %s1036 = scalar_lea.sflag [#allocation4], %s1035
        %s1037 = sand.u32 %s299, 1
        %s1038 = smul.addr %s1037, 2
        %s1039 = scalar_lea.vmem [#allocation5], %s1038
        // Predicated region
        $region73: #{tpu_custom_call.1} parent=67 // pred_check
          %p1040 = pneg %p309
        $region74: #{tpu_custom_call.1} parent=67 // pred_check_branch
          %1042 = sbr.rel (%p1040) target = $region76
        $region75: #{tpu_custom_call.1} parent=67 // pred_region
          %s1044 = ssub.s32 32, 32
          %1045 = vsyncadd %s1036, %s1044
          %s1046 = smul.addr %s29, 32
          %s1047 = scalar_lea.hbm %s12, %s1046
          %s1049 = sshll.u32 %s1039, 4
          %s1050 = int_to_ptr.vmem [resolvable:$true] %s1049
          %1052 = dma.vmem_to_hbm [thread:$0]  %s1050, 32, %s1047, %s1036
        $region76: #{tpu_custom_call.1} parent=67 // pred_fallthru
          _
      $region68: #{tpu_custom_call.1} parent=5 // pred_fallthru
        _
      %p1053 = scmp.le.s32.totalorder 2, %s24
      // Predicated region
      $region77: #{tpu_custom_call.1} parent=5 // pred_check
        %p1054 = pneg %p1053
      $region78: #{tpu_custom_call.1} parent=5 // pred_check_branch
        %1056 = sbr.rel (%p1054) target = $region80
      $region79: #{tpu_custom_call.1} parent=5 // pred_region
        %s1057 = ssub.s32 %s24, 2
        // Predicated region
        $region81: #{tpu_custom_call.1} parent=79 // pred_check
          %p1058 = pneg %p315
        $region82: #{tpu_custom_call.1} parent=79 // pred_check_branch
          %1060 = sbr.rel (%p1058) target = $region84
        $region83: #{tpu_custom_call.1} parent=79 // pred_region
          %s1061 = sand.u32 %s300, 1
          %s1062 = scalar_lea.sflag [#allocation4], %s1061
          %s1063 = sand.u32 %s300, 1
          %s1064 = smul.addr %s1063, 2
          %s1065 = scalar_lea.vmem [#allocation5], %s1064
          %1066 = dma.done %s1062, 32
        $region84: #{tpu_custom_call.1} parent=79 // pred_fallthru
          _
      $region80: #{tpu_custom_call.1} parent=5 // pred_fallthru
        _
    $region6: #{tpu_custom_call.1} parent=1 // loop_footer
      %s28 = sadd.s32 1, %s24
    $region7: #{tpu_custom_call.1} parent=1 // loop_footer_branch
      %23 = sbr.rel target = $region3
    $region8: #{tpu_custom_call.1} parent=1 // loop_exit
      _
    %1067 = vsyncpa [#allocation3], 1
    %s1068 = scalar_lea.sflag [#allocation3], 1
    %1069 = vsyncpa %s1068, 1
    %1070 = vsyncpa [#allocation4], 1
    %s1071 = scalar_lea.sflag [#allocation4], 1
    %1072 = vsyncpa %s1071, 1

</llo_original>
